<compile_context>
chip_gen: v5e
topology: v5e:2x2
jax: 0.10.0
libtpu: 0.0.40
codegen_flags: <defaults>
</compile_context>

<pallas_src>
import functools

import jax
import jax.numpy as jnp
from jax import lax
from jax.experimental import pallas as pl
from jax.experimental.pallas import tpu as pltpu


def _round_up(x, m):
    return ((x + m - 1) // m) * m


def _pos_embed_kernel(idx_ref, table_ref, *rest, tag_len, pack, use_dropout):
    """One grid step: gather `block_rows * pack` token embeddings, apply
    dropout mask (if any), store one lane-dense (block_rows, pack*tag_dim)
    tile."""
    if use_dropout:
        mask_ref, out_ref = rest
    else:
        (out_ref,) = rest

    ids = idx_ref[...]                      # (block_rows, pack) int32
    tbl = table_ref[...]                    # (tag_len, tag_dim) f32
    br = ids.shape[0]

    # Embedding gather as one-hot matmul (MXU).  padding_idx=0 is handled by
    # the table's row 0 being all zeros.  One small matmul per packed slot;
    # results are concatenated along lanes to form the packed output row.
    parts = []
    for j in range(pack):                   # static unroll (pack <= 128)
        ids_j = ids[:, j:j + 1]             # (block_rows, 1)
        onehot = (ids_j == lax.broadcasted_iota(jnp.int32, (br, tag_len), 1)
                  ).astype(jnp.float32)     # (block_rows, tag_len)
        parts.append(jnp.dot(onehot, tbl,
                             preferred_element_type=jnp.float32))
    emb = parts[0] if pack == 1 else jnp.concatenate(parts, axis=-1)

    if use_dropout:
        # Inverted dropout: mask holds 0 or 1/(1-p), precomputed on host.
        emb = emb * mask_ref[...]

    out_ref[...] = emb.astype(out_ref.dtype)


def pos_embeddings_forward(pos_seq, table, *, drop_out_rate, rng=None,
                           training=True, block_tokens=2048):
    """pos_seq: (B, S) int ids; table: (tag_len, tag_dim) f32 (row 0 == 0)."""
    B, S = pos_seq.shape
    tag_len, tag_dim = table.shape
    N = B * S
    p = float(drop_out_rate)
    use_dropout = bool(training) and p > 0.0

    # Pack tokens so the output's last dim is 128 lanes (lane-dense stores).
    if tag_dim <= 128 and 128 % tag_dim == 0:
        pack = 128 // tag_dim
    else:
        pack = 1                            # fallback: unpacked layout
    lane_w = pack * tag_dim
    unit = 8 * pack                         # tokens per packed sublane group

    blk = _round_up(min(int(block_tokens), _round_up(N, unit)), unit)
    n_pad = _round_up(N, blk)
    num_blocks = n_pad // blk
    block_rows = blk // pack                # packed output rows per grid step
    r_pad = n_pad // pack                   # total packed output rows

    # Flatten, pad with padding_idx=0 (maps to the zero row), pack row-major.
    ids = pos_seq.reshape(-1).astype(jnp.int32)
    ids = jnp.pad(ids, (0, n_pad - N))
    idx2d = ids.reshape(r_pad, pack)

    table_f32 = table.astype(jnp.float32)

    kernel = functools.partial(_pos_embed_kernel, tag_len=tag_len, pack=pack,
                               use_dropout=use_dropout)

    in_specs = [
        # Per-block slice of the packed index array (O(block) VMEM).
        pl.BlockSpec((block_rows, pack), lambda i: (i, 0)),
        # Tiny embedding table, fully resident every step.
        pl.BlockSpec((tag_len, tag_dim), lambda i: (0, 0)),
    ]
    inputs = [idx2d, table_f32]

    if use_dropout:
        if rng is None:
            rng = jax.random.PRNGKey(0)
        scale = (1.0 / (1.0 - p)) if p < 1.0 else 0.0
        keep = jax.random.bernoulli(rng, 1.0 - p, (r_pad, lane_w))
        mask = keep.astype(jnp.float32) * jnp.float32(scale)
        in_specs.append(pl.BlockSpec((block_rows, lane_w), lambda i: (i, 0)))
        inputs.append(mask)

    bytes_out = r_pad * lane_w * 4
    bytes_in = (idx2d.size * 4 + num_blocks * tag_len * tag_dim * 4
                + (bytes_out if use_dropout else 0))
    cost = pl.CostEstimate(flops=2 * n_pad * tag_len * tag_dim,
                           transcendentals=0,
                           bytes_accessed=bytes_out + bytes_in)

    out_packed = pl.pallas_call(
        kernel,
        out_shape=jax.ShapeDtypeStruct((r_pad, lane_w), jnp.float32),
        grid_spec=pltpu.PrefetchScalarGridSpec(
            num_scalar_prefetch=0,
            grid=(num_blocks,),
            in_specs=in_specs,
            out_specs=pl.BlockSpec((block_rows, lane_w), lambda i: (i, 0)),
        ),
        compiler_params=pltpu.CompilerParams(
            dimension_semantics=("parallel",)),
        cost_estimate=cost,
    )(*inputs)

    # Unpack: (r_pad, pack*tag_dim) row-major == (n_pad, tag_dim).
    out = out_packed.reshape(n_pad, tag_dim)[:N]
    return out.reshape(B, S, tag_dim)


def init_pos_embedding_table(key, tag_len, tag_dim):
    # nn.Embedding default init: N(0, 1); padding_idx=0 row is zeroed.
    table = jax.random.normal(key, (tag_len, tag_dim), dtype=jnp.float32)
    table = table.at[0].set(0.0)
    return table


if __name__ == "__main__":
    # Small, deterministic example consistent with the module's forward:
    # tag_len=16 POS tags, tag_dim=32, batch=2, seq=8, drop_out_rate=0.1.
    tag_len, tag_dim = 16, 32
    B, S = 2, 8
    drop_out_rate = 0.1

    key = jax.random.PRNGKey(0)
    k_tab, k_idx, k_drop = jax.random.split(key, 3)

    table = init_pos_embedding_table(k_tab, tag_len, tag_dim)
    pos_seq = jax.random.randint(k_idx, (B, S), minval=0, maxval=tag_len,
                                 dtype=jnp.int32)

    # Training-mode forward (embedding gather + dropout fused in the kernel).
    out_train = pos_embeddings_forward(pos_seq, table,
                                       drop_out_rate=drop_out_rate,
                                       rng=k_drop, training=True)
    jax.block_until_ready(out_train)

    # Eval-mode forward (dropout is identity) — check against pure-JAX ref.
    out_eval = pos_embeddings_forward(pos_seq, table,
                                      drop_out_rate=drop_out_rate,
                                      training=False)
    jax.block_until_ready(out_eval)

    ref = table[pos_seq]                    # pure-JAX embedding gather
    assert out_eval.shape == (B, S, tag_dim)
    assert jnp.allclose(out_eval, ref, atol=1e-5, rtol=1e-5)
    # Padding id 0 must map to the zero vector.
    assert jnp.allclose(out_eval[pos_seq == 0], 0.0)

    # Training output: every element is either dropped (0) or ref / (1 - p).
    scale = 1.0 / (1.0 - drop_out_rate)
    scaled = ref * scale
    ok = (jnp.abs(out_train) <= 1e-6) | \
         (jnp.abs(out_train - scaled) <= 1e-4 * (1.0 + jnp.abs(scaled)))
    assert bool(jnp.all(ok))

    print("KERNEL_OK")
</pallas_src>

<mosaic_0001>
module attributes {stable_mosaic.version = 11 : i64} {
  func.func @_pos_embed_kernel(%arg0: i32, %arg1: memref<8x4xi32, #tpu.memory_space<vmem>>, %arg2: memref<16x32xf32, #tpu.memory_space<vmem>>, %arg3: memref<8x128xf32, #tpu.memory_space<vmem>>, %arg4: memref<8x128xf32, #tpu.memory_space<vmem>>) attributes {dimension_semantics = [#tpu.dimension_semantics<parallel>], iteration_bounds = array<i64: 1>, scalar_prefetch = 0 : i64, scratch_operands = 0 : i64, tpu.core_type = #tpu.core_type<tc>, window_params = [{transform_indices = @transform_0, window_bounds = array<i64: 8, 4>}, {pipeline_mode = #tpu.pipeline_mode<synchronous>, transform_indices = @transform_1, window_bounds = array<i64: 16, 32>}, {transform_indices = @transform_2, window_bounds = array<i64: 8, 128>}, {transform_indices = @transform_3, window_bounds = array<i64: 8, 128>}]} {
    %c0 = arith.constant 0 : index
    %c0_0 = arith.constant 0 : index
    %0 = vector.load %arg1[%c0, %c0_0] : memref<8x4xi32, #tpu.memory_space<vmem>>, vector<8x4xi32>
    %c0_1 = arith.constant 0 : index
    %c0_2 = arith.constant 0 : index
    %1 = vector.load %arg2[%c0_1, %c0_2] : memref<16x32xf32, #tpu.memory_space<vmem>>, vector<16x32xf32>
    %2 = vector.extract_strided_slice %0 {offsets = [0, 0], sizes = [8, 1], strides = [1, 1]} : vector<8x4xi32> to vector<8x1xi32>
    %3 = tpu.iota {dimensions = array<i32: 1>} : vector<8x16xi32>
    %4 = vector.broadcast %2 : vector<8x1xi32> to vector<8x16xi32>
    %5 = arith.cmpi eq, %4, %3 : vector<8x16xi32>
    %6 = arith.extui %5 : vector<8x16xi1> to vector<8x16xi32>
    %7 = arith.sitofp %6 : vector<8x16xi32> to vector<8x16xf32>
    %cst = arith.constant dense<0.000000e+00> : vector<8x32xf32>
    %8 = tpu.matmul %7, %1, %cst {dimension_numbers = #tpu.dot_dimension_numbers<[1], [0], [0], [1], [0, 0, 1, 1], [], []>} : vector<8x16xf32>, vector<16x32xf32>, vector<8x32xf32> -> vector<8x32xf32>
    %9 = vector.extract_strided_slice %0 {offsets = [0, 1], sizes = [8, 1], strides = [1, 1]} : vector<8x4xi32> to vector<8x1xi32>
    %10 = tpu.iota {dimensions = array<i32: 1>} : vector<8x16xi32>
    %11 = vector.broadcast %9 : vector<8x1xi32> to vector<8x16xi32>
    %12 = arith.cmpi eq, %11, %10 : vector<8x16xi32>
    %13 = arith.extui %12 : vector<8x16xi1> to vector<8x16xi32>
    %14 = arith.sitofp %13 : vector<8x16xi32> to vector<8x16xf32>
    %cst_3 = arith.constant dense<0.000000e+00> : vector<8x32xf32>
    %15 = tpu.matmul %14, %1, %cst_3 {dimension_numbers = #tpu.dot_dimension_numbers<[1], [0], [0], [1], [0, 0, 1, 1], [], []>} : vector<8x16xf32>, vector<16x32xf32>, vector<8x32xf32> -> vector<8x32xf32>
    %16 = vector.extract_strided_slice %0 {offsets = [0, 2], sizes = [8, 1], strides = [1, 1]} : vector<8x4xi32> to vector<8x1xi32>
    %17 = tpu.iota {dimensions = array<i32: 1>} : vector<8x16xi32>
    %18 = vector.broadcast %16 : vector<8x1xi32> to vector<8x16xi32>
    %19 = arith.cmpi eq, %18, %17 : vector<8x16xi32>
    %20 = arith.extui %19 : vector<8x16xi1> to vector<8x16xi32>
    %21 = arith.sitofp %20 : vector<8x16xi32> to vector<8x16xf32>
    %cst_4 = arith.constant dense<0.000000e+00> : vector<8x32xf32>
    %22 = tpu.matmul %21, %1, %cst_4 {dimension_numbers = #tpu.dot_dimension_numbers<[1], [0], [0], [1], [0, 0, 1, 1], [], []>} : vector<8x16xf32>, vector<16x32xf32>, vector<8x32xf32> -> vector<8x32xf32>
    %23 = vector.extract_strided_slice %0 {offsets = [0, 3], sizes = [8, 1], strides = [1, 1]} : vector<8x4xi32> to vector<8x1xi32>
    %24 = tpu.iota {dimensions = array<i32: 1>} : vector<8x16xi32>
    %25 = vector.broadcast %23 : vector<8x1xi32> to vector<8x16xi32>
    %26 = arith.cmpi eq, %25, %24 : vector<8x16xi32>
    %27 = arith.extui %26 : vector<8x16xi1> to vector<8x16xi32>
    %28 = arith.sitofp %27 : vector<8x16xi32> to vector<8x16xf32>
    %cst_5 = arith.constant dense<0.000000e+00> : vector<8x32xf32>
    %29 = tpu.matmul %28, %1, %cst_5 {dimension_numbers = #tpu.dot_dimension_numbers<[1], [0], [0], [1], [0, 0, 1, 1], [], []>} : vector<8x16xf32>, vector<16x32xf32>, vector<8x32xf32> -> vector<8x32xf32>
    %30 = tpu.concatenate %8, %15, %22, %29 in 1 : vector<8x32xf32>, vector<8x32xf32>, vector<8x32xf32>, vector<8x32xf32> -> vector<8x128xf32>
    %c0_6 = arith.constant 0 : index
    %c0_7 = arith.constant 0 : index
    %31 = vector.load %arg3[%c0_6, %c0_7] : memref<8x128xf32, #tpu.memory_space<vmem>>, vector<8x128xf32>
    %32 = arith.mulf %30, %31 : vector<8x128xf32>
    %c0_8 = arith.constant 0 : index
    %c0_9 = arith.constant 0 : index
    %33 = vector.load %arg4[%c0_8, %c0_9] : memref<8x128xf32, #tpu.memory_space<vmem>>, vector<8x128xf32>
    tpu.vector_store %arg4[%c0_8, %c0_9], %32 {strides = array<i32>} : memref<8x128xf32, #tpu.memory_space<vmem>>, vector<8x128xf32>,
    return
  }
  func.func @transform_0(%arg0: i32) -> (i32, i32) {
    %c0_i32 = arith.constant 0 : i32
    %c0_i32_0 = arith.constant 0 : i32
    return %arg0, %c0_i32 : i32, i32
  }
  func.func @transform_1(%arg0: i32) -> (i32, i32) {
    %c0_i32 = arith.constant 0 : i32
    %c0_i32_0 = arith.constant 0 : i32
    %c0_i32_1 = arith.constant 0 : i32
    return %c0_i32, %c0_i32_0 : i32, i32
  }
  func.func @transform_2(%arg0: i32) -> (i32, i32) {
    %c0_i32 = arith.constant 0 : i32
    %c0_i32_0 = arith.constant 0 : i32
    return %arg0, %c0_i32 : i32, i32
  }
  func.func @transform_3(%arg0: i32) -> (i32, i32) {
    %c0_i32 = arith.constant 0 : i32
    %c0_i32_0 = arith.constant 0 : i32
    return %arg0, %c0_i32 : i32, i32
  }
}

</mosaic_0001>

<llo_original>
// kernel: tpu_custom_call.1
$region0: #{tpu_custom_call.1}
  #allocation0 [shape = 'u32[]', space=smem, size = 0x4, offset = 0x4, fixed_abs, tag = 'smem constant byte address 0x4 - core index']
  #allocation1 [shape = 'u32[72,128]{1,0:T(1,128)}', space=vmem, size = 0x9000, scoped, tag = 'internal scratch']
  %s0 = inlined_call_operand.vmem [shape: s32[8,4], index: 0, kind: input, shape index: {}]
  %s1 = inlined_call_operand.hbm [shape: f32[16,32], index: 1, kind: input, shape index: {}]
  %s2 = inlined_call_operand.vmem [shape: f32[8,128], index: 2, kind: input, shape index: {}]
  %s3 = inlined_call_operand.hbm [shape: f32[8,128], index: 3, kind: output, shape index: {}]
  %s4 = sld [smem:[#allocation0]]
  $region26: #{tpu_custom_call.1} parent=0
    _
  %s6 = ssub.s32 1, %s4
  %s7 = scalar_select 0, %s6, %s4
  $region1: #{tpu_custom_call.1} parent=0
    #allocation2 [shape = 'u8[8192]{0}', space=vmem, size = 0x2000, scoped, tag = 'input window, operand 1, single buffered']
    #allocation3 [shape = 's32[1]{0}', space=sflag, size = 0x4, scoped, tag = 'scoped memory for tpu_custom_call.1']
    #allocation4 [shape = 's32[1]{0}', space=sflag, size = 0x4, scoped, tag = 'scoped memory for tpu_custom_call.1']
    #allocation5 [shape = 'u8[4096]{0}', space=vmem, size = 0x1000, scoped, tag = 'output window, operand 0, single buffered']
    %8 = vsyncpa [#allocation3], 0
    %9 = vsyncpa [#allocation4], 0
    // Predicated region
    $region2: #{tpu_custom_call.1} parent=1 // pred_check
      _
    $region3: #{tpu_custom_call.1} parent=1 // pred_check_branch
      %11 = sbr.rel (0) target = $region5
    $region4: #{tpu_custom_call.1} parent=1 // pred_region
      _
    $region5: #{tpu_custom_call.1} parent=1 // pred_fallthru
      _
    // Predicated region
    $region6: #{tpu_custom_call.1} parent=1 // pred_check
      _
    $region7: #{tpu_custom_call.1} parent=1 // pred_check_branch
      %13 = sbr.rel (0) target = $region9
    $region8: #{tpu_custom_call.1} parent=1 // pred_region
      %15 = vsyncadd [#allocation3], 0
      %s16 = sshll.u32 %s1, 4
      %s17 = int_to_ptr.hbm [resolvable:$true] %s16
      %s18 = sshll.u32 [#allocation2], 4
      %s19 = int_to_ptr.vmem [resolvable:$true] %s18
      %24 = dma.hbm_to_vmem [thread:$0]  %s17, 256, %s19, [#allocation3], 128, 128, 8
    $region9: #{tpu_custom_call.1} parent=1 // pred_fallthru
      _
    // Predicated region
    $region10: #{tpu_custom_call.1} parent=1 // pred_check
      _
    $region11: #{tpu_custom_call.1} parent=1 // pred_check_branch
      %26 = sbr.rel (0) target = $region13
    $region12: #{tpu_custom_call.1} parent=1 // pred_region
      _
    $region13: #{tpu_custom_call.1} parent=1 // pred_fallthru
      _
    // Predicated region
    $region14: #{tpu_custom_call.1} parent=1 // pred_check
      _
    $region15: #{tpu_custom_call.1} parent=1 // pred_check_branch
      %28 = sbr.rel (0) target = $region17
    $region16: #{tpu_custom_call.1} parent=1 // pred_region
      %30 = dma.done [#allocation3], 256
    $region17: #{tpu_custom_call.1} parent=1 // pred_fallthru
      _
    %v31 = vld [vmem:[%s0] sm:$0xff]
    %v32 = vld [vmem:[#allocation2] sm:$0xff]
    %v33 = vld [vmem:[#allocation2 + $0x8] sm:$0xff]
    %v34 = vlaneseq
    %v35 = vand.u32 %v34, 127
    %36 = vset.pattern.permute.xlu0 0
    %37 = vperm.xlu0 %36, %v31
    %v38 = vpop.permute.xlu0 %37
    %vm39 = vcmp.eq.s32.totalorder %v38, %v35
    %v40 = vsel %vm39, 1, 0
    %v41 = vcvt.s32.f32 %v40
    %vm42 = vcmask 130048
    %v44 = vsel %vm42, %v41, 0
    %46 = vmatpush.msra.mxu0 0.0
    %47 = vmatpush.msra.mxu0 0.0
    %48 = vmatpush.msra.mxu0 0.0
    %49 = vmatpush.msra.mxu0 0.0
    %50 = vmatpush.msra.mxu0 0.0
    %51 = vmatpush.msra.mxu0 0.0
    %52 = vmatpush.msra.mxu0 0.0
    %53 = vmatpush.msra.mxu0 0.0
    %54 = vmatpush.msra.mxu0 0.0
    %55 = vmatpush.msra.mxu0 0.0
    %56 = vmatpush.msra.mxu0 0.0
    %57 = vmatpush.msra.mxu0 0.0
    %58 = vmatpush.msra.mxu0 0.0
    %59 = vmatpush.msra.mxu0 0.0
    %60 = vmatpush.msra.mxu0 %v33
    %61 = vmatpush.msra.mxu0 %v32
    %62 = vmatmul.f32.gmra.mxu0 %v44
    %v63 = vpop.f32.mrf.mxu0
    %v64 = vadd.f32 0.0, %v63
    %65 = vdwg.mxu0
    %66 = vset.pattern.permute.xlu0 1
    %67 = vperm.xlu0 %66, %v31
    %v68 = vpop.permute.xlu0 %67
    %vm69 = vcmp.eq.s32.totalorder %v68, %v35
    %v70 = vsel %vm69, 1, 0
    %v71 = vcvt.s32.f32 %v70
    %v73 = vsel %vm42, %v71, 0
    %75 = vmatpush.msra.mxu0 0.0
    %76 = vmatpush.msra.mxu0 0.0
    %77 = vmatpush.msra.mxu0 0.0
    %78 = vmatpush.msra.mxu0 0.0
    %79 = vmatpush.msra.mxu0 0.0
    %80 = vmatpush.msra.mxu0 0.0
    %81 = vmatpush.msra.mxu0 0.0
    %82 = vmatpush.msra.mxu0 0.0
    %83 = vmatpush.msra.mxu0 0.0
    %84 = vmatpush.msra.mxu0 0.0
    %85 = vmatpush.msra.mxu0 0.0
    %86 = vmatpush.msra.mxu0 0.0
    %87 = vmatpush.msra.mxu0 0.0
    %88 = vmatpush.msra.mxu0 0.0
    %89 = vmatpush.msra.mxu0 %v33
    %90 = vmatpush.msra.mxu0 %v32
    %91 = vmatmul.f32.gmra.mxu0 %v73
    %v92 = vpop.f32.mrf.mxu0
    %v93 = vadd.f32 0.0, %v92
    %94 = vdwg.mxu0
    %95 = vset.pattern.permute.xlu0 2
    %96 = vperm.xlu0 %95, %v31
    %v97 = vpop.permute.xlu0 %96
    %vm98 = vcmp.eq.s32.totalorder %v97, %v35
    %v99 = vsel %vm98, 1, 0
    %v100 = vcvt.s32.f32 %v99
    %v102 = vsel %vm42, %v100, 0
    %104 = vmatpush.msra.mxu0 0.0
    %105 = vmatpush.msra.mxu0 0.0
    %106 = vmatpush.msra.mxu0 0.0
    %107 = vmatpush.msra.mxu0 0.0
    %108 = vmatpush.msra.mxu0 0.0
    %109 = vmatpush.msra.mxu0 0.0
    %110 = vmatpush.msra.mxu0 0.0
    %111 = vmatpush.msra.mxu0 0.0
    %112 = vmatpush.msra.mxu0 0.0
    %113 = vmatpush.msra.mxu0 0.0
    %114 = vmatpush.msra.mxu0 0.0
    %115 = vmatpush.msra.mxu0 0.0
    %116 = vmatpush.msra.mxu0 0.0
    %117 = vmatpush.msra.mxu0 0.0
    %118 = vmatpush.msra.mxu0 %v33
    %119 = vmatpush.msra.mxu0 %v32
    %120 = vmatmul.f32.gmra.mxu0 %v102
    %v121 = vpop.f32.mrf.mxu0
    %v122 = vadd.f32 0.0, %v121
    %123 = vdwg.mxu0
    %124 = vset.pattern.permute.xlu0 3
    %125 = vperm.xlu0 %124, %v31
    %v126 = vpop.permute.xlu0 %125
    %vm127 = vcmp.eq.s32.totalorder %v126, %v35
    %v128 = vsel %vm127, 1, 0
    %v129 = vcvt.s32.f32 %v128
    %v131 = vsel %vm42, %v129, 0
    %133 = vmatpush.msra.mxu0 0.0
    %134 = vmatpush.msra.mxu0 0.0
    %135 = vmatpush.msra.mxu0 0.0
    %136 = vmatpush.msra.mxu0 0.0
    %137 = vmatpush.msra.mxu0 0.0
    %138 = vmatpush.msra.mxu0 0.0
    %139 = vmatpush.msra.mxu0 0.0
    %140 = vmatpush.msra.mxu0 0.0
    %141 = vmatpush.msra.mxu0 0.0
    %142 = vmatpush.msra.mxu0 0.0
    %143 = vmatpush.msra.mxu0 0.0
    %144 = vmatpush.msra.mxu0 0.0
    %145 = vmatpush.msra.mxu0 0.0
    %146 = vmatpush.msra.mxu0 0.0
    %147 = vmatpush.msra.mxu0 %v33
    %148 = vmatpush.msra.mxu0 %v32
    %149 = vmatmul.f32.gmra.mxu0 %v131
    %v150 = vpop.f32.mrf.mxu0
    %v151 = vadd.f32 0.0, %v150
    %152 = vdwg.mxu0
    %154 = vrot.lane.b32.xlu0 %v93, 32
    %v155 = vpop.permute.xlu0 %154
    %158 = vrot.lane.b32.xlu0 %v122, 64
    %v159 = vpop.permute.xlu0 %158
    %162 = vrot.lane.b32.xlu0 %v151, 96
    %v163 = vpop.permute.xlu0 %162
    %vm165 = vcmask 261120
    %v166 = vsel %vm165, %v64, %v155
    %vm167 = vcmask 523264
    %v168 = vsel %vm167, %v166, %v159
    %vm169 = vcmask 785408
    %v170 = vsel %vm169, %v168, %v163
    %v171 = vld [vmem:[%s2] sm:$0xff]
    %v172 = vmul.f32 %v170, %v171
    %173 = vst [vmem:[#allocation5] sm:$0xff] %v172
    // Predicated region
    $region18: #{tpu_custom_call.1} parent=1 // pred_check
      _
    $region19: #{tpu_custom_call.1} parent=1 // pred_check_branch
      %175 = sbr.rel (0) target = $region21
    $region20: #{tpu_custom_call.1} parent=1 // pred_region
      %177 = vsyncadd [#allocation4], 0
      %s179 = sshll.u32 [#allocation5], 4
      %s180 = int_to_ptr.vmem [resolvable:$true] %s179
      %s181 = sshll.u32 %s3, 4
      %s182 = int_to_ptr.hbm [resolvable:$true] %s181
      %184 = dma.vmem_to_hbm [thread:$0]  %s180, 128, %s182, [#allocation4]
    $region21: #{tpu_custom_call.1} parent=1 // pred_fallthru
      _
    // Predicated region
    $region22: #{tpu_custom_call.1} parent=1 // pred_check
      _
    $region23: #{tpu_custom_call.1} parent=1 // pred_check_branch
      %186 = sbr.rel (0) target = $region25
    $region24: #{tpu_custom_call.1} parent=1 // pred_region
      %188 = dma.done [#allocation4], 128
    $region25: #{tpu_custom_call.1} parent=1 // pred_fallthru
      _
    %189 = vsyncpa [#allocation3], 1
    %190 = vsyncpa [#allocation4], 1

</llo_original>
